<compile_context>
chip_gen: v7x
topology: tpu7x:2x2x1
jax: 0.10.0
libtpu: 0.0.40
codegen_flags: <defaults>
</compile_context>

<pallas_src>
import math

import jax
import jax.numpy as jnp
from jax.experimental import pallas as pl
from jax.experimental.pallas import tpu as pltpu

# ----------------------------- model dims -----------------------------------
B = 2          # batch
S = 8          # sequence length
E = 32         # embed_size
H = 4          # num_heads
HD = E // H    # head dim
F = 64         # ff_dim
LN_EPS = 1e-5

BS = B * S          # 16 activation rows
BHS = B * H * S     # 64 stacked (batch, head, seq) rows
LANES = 128         # lane-padded slab width

# weight/constant slab row offsets (all multiples of 8 sublanes)
_W_QKV = 0                  # (E, 3E)  fused QKV weights
_W_O   = _W_QKV + E         # (E, E)   output projection
_W_1   = _W_O + E           # (E, F)   FFN up
_W_2   = _W_1 + E           # (F, E)   FFN down
_HMASK = _W_2 + F           # (BHS, E) head block-diagonal {0, 1}
_BMASK = _HMASK + BHS       # (BHS, BS) cross-batch additive {0, -1e30}
_WROWS = _BMASK + BHS       # 288 total rows


# ------------------------------ kernel ---------------------------------------
def decoder_layer_kernel(x_ref, w_ref, bvec_ref, o_ref):
    # Single grid step: whole (BS, E) activation slab resident in VMEM.
    x = x_ref[...].astype(jnp.float32)                                    # (BS, E)

    # ---- static slices out of the packed slabs (free) ----------------------
    wqkv  = w_ref[_W_QKV:_W_QKV + E, 0:3 * E]                             # (E, 3E)
    wo    = w_ref[_W_O:_W_O + E, 0:E]                                     # (E, E)
    w1    = w_ref[_W_1:_W_1 + E, 0:F]                                     # (E, F)
    w2    = w_ref[_W_2:_W_2 + F, 0:E]                                     # (F, E)
    hmask = w_ref[_HMASK:_HMASK + BHS, 0:E]                               # (BHS, E)
    bmask = w_ref[_BMASK:_BMASK + BHS, 0:BS]                              # (BHS, BS)

    bv   = bvec_ref[...]                                                  # (8, 128), one vreg
    bqkv = bv[0:1, 0:3 * E]
    bo   = bv[1:2, 0:E]
    b1   = bv[2:3, 0:F]
    b2   = bv[3:4, 0:E]
    g1   = bv[4:5, 0:E]
    be1  = bv[5:6, 0:E]
    g2   = bv[6:7, 0:E]
    be2  = bv[7:8, 0:E]

    # ---- fused Q/K/V projection: one MXU dispatch ---------------------------
    qkv = jnp.dot(x, wqkv, preferred_element_type=jnp.float32) + bqkv     # (BS, 3E)
    q = qkv[:, 0 * E:1 * E]
    k = qkv[:, 1 * E:2 * E]
    v = qkv[:, 2 * E:3 * E]

    # ---- attention: batch + head fused --------------------------------------
    # Restack Q along sublanes as (batch, head, seq) rows; row block (b, h) keeps only
    # head-h feature columns via the block-diagonal head mask.
    qstack = jnp.concatenate(
        [q[b * S:(b + 1) * S, :] for b in range(B) for _ in range(H)], axis=0)
    qstack = qstack * hmask                                               # (BHS, E)

    scale = 1.0 / math.sqrt(HD)
    # All B*H per-head score matrices in ONE MXU dispatch (contract last dims, no
    # explicit transpose); additive mask kills cross-batch columns before softmax.
    scores = jax.lax.dot_general(
        qstack, k, (((1,), (1,)), ((), ())),
        preferred_element_type=jnp.float32) * scale + bmask               # (BHS, BS)

    # Single softmax pass over the full last dim for all batches and heads.
    m = jnp.max(scores, axis=-1, keepdims=True)
    e = jnp.exp(scores - m)
    d = jnp.sum(e, axis=-1, keepdims=True)
    p = e * pl.reciprocal(d)                                              # exact EUP path

    # All contexts in ONE MXU dispatch; per-head columns recovered by masking and summing
    # the H aligned 8-sublane blocks per batch (heads have disjoint nonzero columns).
    ctx_full = jax.lax.dot_general(
        p, v, (((1,), (0,)), ((), ())),
        preferred_element_type=jnp.float32) * hmask                       # (BHS, E)
    ctx_blocks = []
    for b in range(B):
        acc = ctx_full[(b * H + 0) * S:(b * H + 1) * S, :]
        for h in range(1, H):
            acc = acc + ctx_full[(b * H + h) * S:(b * H + h + 1) * S, :]
        ctx_blocks.append(acc)
    ctx = jnp.concatenate(ctx_blocks, axis=0)                             # (BS, E)

    attn = jnp.dot(ctx, wo, preferred_element_type=jnp.float32) + bo

    # ---- residual + LayerNorm 1 (one-pass sum / sum-of-squares) -------------
    h1 = x + attn
    mu1 = jnp.sum(h1, axis=-1, keepdims=True) * (1.0 / E)
    ex2_1 = jnp.sum(h1 * h1, axis=-1, keepdims=True) * (1.0 / E)
    var1 = ex2_1 - mu1 * mu1
    h1n = (h1 - mu1) * jax.lax.rsqrt(var1 + LN_EPS) * g1 + be1

    # ---- FeedForward: Linear -> ReLU -> Linear -------------------------------
    ff = jnp.dot(h1n, w1, preferred_element_type=jnp.float32) + b1
    ff = jnp.maximum(ff, 0.0)
    ff = jnp.dot(ff, w2, preferred_element_type=jnp.float32) + b2

    # ---- residual + LayerNorm 2 ----------------------------------------------
    h2 = h1n + ff
    mu2 = jnp.sum(h2, axis=-1, keepdims=True) * (1.0 / E)
    ex2_2 = jnp.sum(h2 * h2, axis=-1, keepdims=True) * (1.0 / E)
    var2 = ex2_2 - mu2 * mu2
    out = (h2 - mu2) * jax.lax.rsqrt(var2 + LN_EPS) * g2 + be2

    o_ref[...] = out.astype(o_ref.dtype)


# --------------------------- packing (once, at init) --------------------------
def _pad_lanes(a):
    return jnp.pad(a, ((0, 0), (0, LANES - a.shape[1])))


def pack_params(p):
    """Run ONCE at init (outside the per-call path): fuse QKV, build the attention mask
    constants, and pack everything into two lane-padded slabs (3 input DMAs total)."""
    wqkv = jnp.concatenate([p["wq"], p["wk"], p["wv"]], axis=1)           # (E, 3E)
    bqkv = jnp.concatenate([p["bq"], p["bk"], p["bv"]], axis=1)           # (1, 3E)

    # Head block-diagonal mask: row block (b, h) keeps only head-h feature columns.
    row_head = (jnp.arange(BHS)[:, None] // S) % H
    col_head = jnp.arange(E)[None, :] // HD
    hmask = (row_head == col_head).astype(jnp.float32)                    # (BHS, E)

    # Cross-batch additive mask: -1e30 where a score column belongs to another batch.
    row_batch = jnp.arange(BHS)[:, None] // (H * S)
    col_batch = jnp.arange(BS)[None, :] // S
    bmask = jnp.where(row_batch == col_batch, 0.0, -1e30).astype(jnp.float32)

    w_slab = jnp.concatenate(
        [_pad_lanes(a) for a in (wqkv, p["wo"], p["w1"], p["w2"], hmask, bmask)],
        axis=0)                                                            # (288, 128)
    assert w_slab.shape == (_WROWS, LANES)

    b_slab = jnp.concatenate(
        [_pad_lanes(a) for a in (bqkv, p["bo"], p["b1"], p["b2"],
                                 p["g1"], p["be1"], p["g2"], p["be2"])],
        axis=0)                                                            # (8, 128)
    return w_slab, b_slab


# ------------------------------ wrapper ---------------------------------------
def decoder_layer(x, w_slab, b_slab):
    """x: (B, S, E) float32.  w_slab / b_slab: packed parameters from pack_params()."""
    args = (x.reshape(BS, E), w_slab, b_slab)
    in_specs = [pl.BlockSpec(a.shape, lambda i: (0, 0)) for a in args]

    out = pl.pallas_call(
        decoder_layer_kernel,
        out_shape=jax.ShapeDtypeStruct((BS, E), x.dtype),
        grid_spec=pltpu.PrefetchScalarGridSpec(
            num_scalar_prefetch=0,
            grid=(1,),                            # single step, everything VMEM-resident
            in_specs=in_specs,
            out_specs=pl.BlockSpec((BS, E), lambda i: (0, 0)),
        ),
        compiler_params=pltpu.CompilerParams(dimension_semantics=("arbitrary",)),
    )(*args)
    return out.reshape(B, S, E)


# --------------------------- param initialization -----------------------------
def init_params(key):
    ks = jax.random.split(key, 12)

    def lin(k, fan_in, shape):
        return jax.random.normal(k, shape, jnp.float32) / math.sqrt(fan_in)

    p = {
        "wq": lin(ks[0], E, (E, E)), "bq": 0.01 * jax.random.normal(ks[1], (1, E), jnp.float32),
        "wk": lin(ks[2], E, (E, E)), "bk": 0.01 * jax.random.normal(ks[3], (1, E), jnp.float32),
        "wv": lin(ks[4], E, (E, E)), "bv": 0.01 * jax.random.normal(ks[5], (1, E), jnp.float32),
        "wo": lin(ks[6], E, (E, E)), "bo": 0.01 * jax.random.normal(ks[7], (1, E), jnp.float32),
        "w1": lin(ks[8], E, (E, F)), "b1": 0.01 * jax.random.normal(ks[9], (1, F), jnp.float32),
        "w2": lin(ks[10], F, (F, E)), "b2": 0.01 * jax.random.normal(ks[11], (1, E), jnp.float32),
        "g1": jnp.ones((1, E), jnp.float32), "be1": jnp.zeros((1, E), jnp.float32),
        "g2": jnp.ones((1, E), jnp.float32), "be2": jnp.zeros((1, E), jnp.float32),
    }
    return p


# ------------------------------ pure-JAX reference ----------------------------
def reference(x, p):
    def ln(h, g, b):
        mu = h.mean(-1, keepdims=True)
        var = ((h - mu) ** 2).mean(-1, keepdims=True)
        return (h - mu) / jnp.sqrt(var + LN_EPS) * g + b

    q = x @ p["wq"] + p["bq"]
    k = x @ p["wk"] + p["bk"]
    v = x @ p["wv"] + p["bv"]
    q = q.reshape(B, S, H, HD).transpose(0, 2, 1, 3)
    k = k.reshape(B, S, H, HD).transpose(0, 2, 1, 3)
    v = v.reshape(B, S, H, HD).transpose(0, 2, 1, 3)
    s = jnp.einsum("bhqd,bhkd->bhqk", q, k) / math.sqrt(HD)
    pattn = jax.nn.softmax(s, axis=-1)
    ctx = jnp.einsum("bhqk,bhkd->bhqd", pattn, v).transpose(0, 2, 1, 3).reshape(B, S, E)
    attn_out = ctx @ p["wo"] + p["bo"]
    h1 = ln(x + attn_out, p["g1"], p["be1"])
    ff = jnp.maximum(h1 @ p["w1"] + p["b1"], 0.0) @ p["w2"] + p["b2"]
    return ln(h1 + ff, p["g2"], p["be2"])


# ----------------------------------- main -------------------------------------
if __name__ == "__main__":
    key = jax.random.PRNGKey(0)
    kx, kp = jax.random.split(key)
    x = jax.random.normal(kx, (B, S, E), jnp.float32)
    params = init_params(kp)

    # Packing happens once here (init time), NOT inside the per-call path.
    w_slab, b_slab = pack_params(params)

    out = jax.block_until_ready(decoder_layer(x, w_slab, b_slab))
    ref = reference(x, params)

    assert out.shape == (B, S, E)
    assert jnp.allclose(out, ref, atol=1e-4, rtol=1e-4), (
        f"max abs err = {jnp.max(jnp.abs(out - ref))}")
    print("KERNEL_OK")
</pallas_src>

<mosaic_0001>
module attributes {stable_mosaic.version = 11 : i64} {
  func.func @decoder_layer_kernel(%arg0: i32, %arg1: memref<16x32xf32, #tpu.memory_space<vmem>>, %arg2: memref<288x128xf32, #tpu.memory_space<vmem>>, %arg3: memref<8x128xf32, #tpu.memory_space<vmem>>, %arg4: memref<16x32xf32, #tpu.memory_space<vmem>>) attributes {dimension_semantics = [#tpu.dimension_semantics<arbitrary>], iteration_bounds = array<i64: 1>, scalar_prefetch = 0 : i64, scratch_operands = 0 : i64, tpu.core_type = #tpu.core_type<tc>, window_params = [{pipeline_mode = #tpu.pipeline_mode<synchronous>, transform_indices = @transform_0, window_bounds = array<i64: 16, 32>}, {pipeline_mode = #tpu.pipeline_mode<synchronous>, transform_indices = @transform_1, window_bounds = array<i64: 288, 128>}, {pipeline_mode = #tpu.pipeline_mode<synchronous>, transform_indices = @transform_2, window_bounds = array<i64: 8, 128>}, {pipeline_mode = #tpu.pipeline_mode<synchronous>, transform_indices = @transform_3, window_bounds = array<i64: 16, 32>}]} {
    %c0 = arith.constant 0 : index
    %c0_0 = arith.constant 0 : index
    %0 = vector.load %arg1[%c0, %c0_0] : memref<16x32xf32, #tpu.memory_space<vmem>>, vector<16x32xf32>
    %c0_1 = arith.constant 0 : index
    %c0_2 = arith.constant 0 : index
    %1 = vector.load %arg2[%c0_1, %c0_2] : memref<288x128xf32, #tpu.memory_space<vmem>>, vector<32x96xf32>
    %c32 = arith.constant 32 : index
    %c0_3 = arith.constant 0 : index
    %2 = vector.load %arg2[%c32, %c0_3] : memref<288x128xf32, #tpu.memory_space<vmem>>, vector<32x32xf32>
    %c64 = arith.constant 64 : index
    %c0_4 = arith.constant 0 : index
    %3 = vector.load %arg2[%c64, %c0_4] : memref<288x128xf32, #tpu.memory_space<vmem>>, vector<32x64xf32>
    %c96 = arith.constant 96 : index
    %c0_5 = arith.constant 0 : index
    %4 = vector.load %arg2[%c96, %c0_5] : memref<288x128xf32, #tpu.memory_space<vmem>>, vector<64x32xf32>
    %c160 = arith.constant 160 : index
    %c0_6 = arith.constant 0 : index
    %5 = vector.load %arg2[%c160, %c0_6] : memref<288x128xf32, #tpu.memory_space<vmem>>, vector<64x32xf32>
    %c224 = arith.constant 224 : index
    %c0_7 = arith.constant 0 : index
    %6 = vector.load %arg2[%c224, %c0_7] : memref<288x128xf32, #tpu.memory_space<vmem>>, vector<64x16xf32>
    %c0_8 = arith.constant 0 : index
    %c0_9 = arith.constant 0 : index
    %7 = vector.load %arg3[%c0_8, %c0_9] : memref<8x128xf32, #tpu.memory_space<vmem>>, vector<8x128xf32>
    %8 = vector.extract_strided_slice %7 {offsets = [0, 0], sizes = [1, 96], strides = [1, 1]} : vector<8x128xf32> to vector<1x96xf32>
    %9 = vector.extract_strided_slice %7 {offsets = [1, 0], sizes = [1, 32], strides = [1, 1]} : vector<8x128xf32> to vector<1x32xf32>
    %10 = vector.extract_strided_slice %7 {offsets = [2, 0], sizes = [1, 64], strides = [1, 1]} : vector<8x128xf32> to vector<1x64xf32>
    %11 = vector.extract_strided_slice %7 {offsets = [3, 0], sizes = [1, 32], strides = [1, 1]} : vector<8x128xf32> to vector<1x32xf32>
    %12 = vector.extract_strided_slice %7 {offsets = [4, 0], sizes = [1, 32], strides = [1, 1]} : vector<8x128xf32> to vector<1x32xf32>
    %13 = vector.extract_strided_slice %7 {offsets = [5, 0], sizes = [1, 32], strides = [1, 1]} : vector<8x128xf32> to vector<1x32xf32>
    %14 = vector.extract_strided_slice %7 {offsets = [6, 0], sizes = [1, 32], strides = [1, 1]} : vector<8x128xf32> to vector<1x32xf32>
    %15 = vector.extract_strided_slice %7 {offsets = [7, 0], sizes = [1, 32], strides = [1, 1]} : vector<8x128xf32> to vector<1x32xf32>
    %cst = arith.constant dense<0.000000e+00> : vector<16x96xf32>
    %16 = tpu.matmul %0, %1, %cst {dimension_numbers = #tpu.dot_dimension_numbers<[1], [0], [0], [1], [0, 0, 1, 1], [], []>} : vector<16x32xf32>, vector<32x96xf32>, vector<16x96xf32> -> vector<16x96xf32>
    %17 = vector.broadcast %8 : vector<1x96xf32> to vector<16x96xf32>
    %18 = arith.addf %16, %17 : vector<16x96xf32>
    %19 = vector.extract_strided_slice %18 {offsets = [0, 0], sizes = [16, 32], strides = [1, 1]} : vector<16x96xf32> to vector<16x32xf32>
    %20 = vector.extract_strided_slice %18 {offsets = [0, 32], sizes = [16, 32], strides = [1, 1]} : vector<16x96xf32> to vector<16x32xf32>
    %21 = vector.extract_strided_slice %18 {offsets = [0, 64], sizes = [16, 32], strides = [1, 1]} : vector<16x96xf32> to vector<16x32xf32>
    %22 = vector.extract_strided_slice %19 {offsets = [0, 0], sizes = [8, 32], strides = [1, 1]} : vector<16x32xf32> to vector<8x32xf32>
    %23 = vector.extract_strided_slice %19 {offsets = [0, 0], sizes = [8, 32], strides = [1, 1]} : vector<16x32xf32> to vector<8x32xf32>
    %24 = vector.extract_strided_slice %19 {offsets = [0, 0], sizes = [8, 32], strides = [1, 1]} : vector<16x32xf32> to vector<8x32xf32>
    %25 = vector.extract_strided_slice %19 {offsets = [0, 0], sizes = [8, 32], strides = [1, 1]} : vector<16x32xf32> to vector<8x32xf32>
    %26 = vector.extract_strided_slice %19 {offsets = [8, 0], sizes = [8, 32], strides = [1, 1]} : vector<16x32xf32> to vector<8x32xf32>
    %27 = vector.extract_strided_slice %19 {offsets = [8, 0], sizes = [8, 32], strides = [1, 1]} : vector<16x32xf32> to vector<8x32xf32>
    %28 = vector.extract_strided_slice %19 {offsets = [8, 0], sizes = [8, 32], strides = [1, 1]} : vector<16x32xf32> to vector<8x32xf32>
    %29 = vector.extract_strided_slice %19 {offsets = [8, 0], sizes = [8, 32], strides = [1, 1]} : vector<16x32xf32> to vector<8x32xf32>
    %30 = tpu.concatenate %22, %23, %24, %25, %26, %27, %28, %29 in 0 : vector<8x32xf32>, vector<8x32xf32>, vector<8x32xf32>, vector<8x32xf32>, vector<8x32xf32>, vector<8x32xf32>, vector<8x32xf32>, vector<8x32xf32> -> vector<64x32xf32>
    %31 = arith.mulf %30, %5 : vector<64x32xf32>
    %cst_10 = arith.constant dense<0.000000e+00> : vector<64x16xf32>
    %32 = tpu.matmul %31, %20, %cst_10 {dimension_numbers = #tpu.dot_dimension_numbers<[1], [1], [0], [0], [0, 0, 1, 0], [], []>} : vector<64x32xf32>, vector<16x32xf32>, vector<64x16xf32> -> vector<64x16xf32>
    %cst_11 = arith.constant 0.353553385 : f32
    %33 = vector.broadcast %cst_11 : f32 to vector<64x16xf32>
    %34 = arith.mulf %32, %33 : vector<64x16xf32>
    %35 = arith.addf %34, %6 : vector<64x16xf32>
    %cst_12 = arith.constant dense<0xFF800000> : vector<64xf32>
    %36 = vector.multi_reduction <maximumf>, %35, %cst_12 [1] : vector<64x16xf32> to vector<64xf32>
    %37 = vector.shape_cast %36 : vector<64xf32> to vector<64x1xf32>
    %38 = vector.broadcast %37 : vector<64x1xf32> to vector<64x16xf32>
    %39 = arith.subf %35, %38 : vector<64x16xf32>
    %40 = math.exp %39 : vector<64x16xf32>
    %cst_13 = arith.constant dense<0.000000e+00> : vector<64xf32>
    %41 = vector.multi_reduction <add>, %40, %cst_13 [1] : vector<64x16xf32> to vector<64xf32>
    %42 = vector.shape_cast %41 : vector<64xf32> to vector<64x1xf32>
    %43 = tpu.reciprocal %42 : vector<64x1xf32> -> vector<64x1xf32>
    %44 = vector.broadcast %43 : vector<64x1xf32> to vector<64x16xf32>
    %45 = arith.mulf %40, %44 : vector<64x16xf32>
    %cst_14 = arith.constant dense<0.000000e+00> : vector<64x32xf32>
    %46 = tpu.matmul %45, %21, %cst_14 {dimension_numbers = #tpu.dot_dimension_numbers<[1], [0], [0], [1], [0, 0, 1, 1], [], []>} : vector<64x16xf32>, vector<16x32xf32>, vector<64x32xf32> -> vector<64x32xf32>
    %47 = arith.mulf %46, %5 : vector<64x32xf32>
    %48 = vector.extract_strided_slice %47 {offsets = [0, 0], sizes = [8, 32], strides = [1, 1]} : vector<64x32xf32> to vector<8x32xf32>
    %49 = vector.extract_strided_slice %47 {offsets = [8, 0], sizes = [8, 32], strides = [1, 1]} : vector<64x32xf32> to vector<8x32xf32>
    %50 = arith.addf %48, %49 : vector<8x32xf32>
    %51 = vector.extract_strided_slice %47 {offsets = [16, 0], sizes = [8, 32], strides = [1, 1]} : vector<64x32xf32> to vector<8x32xf32>
    %52 = arith.addf %50, %51 : vector<8x32xf32>
    %53 = vector.extract_strided_slice %47 {offsets = [24, 0], sizes = [8, 32], strides = [1, 1]} : vector<64x32xf32> to vector<8x32xf32>
    %54 = arith.addf %52, %53 : vector<8x32xf32>
    %55 = vector.extract_strided_slice %47 {offsets = [32, 0], sizes = [8, 32], strides = [1, 1]} : vector<64x32xf32> to vector<8x32xf32>
    %56 = vector.extract_strided_slice %47 {offsets = [40, 0], sizes = [8, 32], strides = [1, 1]} : vector<64x32xf32> to vector<8x32xf32>
    %57 = arith.addf %55, %56 : vector<8x32xf32>
    %58 = vector.extract_strided_slice %47 {offsets = [48, 0], sizes = [8, 32], strides = [1, 1]} : vector<64x32xf32> to vector<8x32xf32>
    %59 = arith.addf %57, %58 : vector<8x32xf32>
    %60 = vector.extract_strided_slice %47 {offsets = [56, 0], sizes = [8, 32], strides = [1, 1]} : vector<64x32xf32> to vector<8x32xf32>
    %61 = arith.addf %59, %60 : vector<8x32xf32>
    %62 = tpu.concatenate %54, %61 in 0 : vector<8x32xf32>, vector<8x32xf32> -> vector<16x32xf32>
    %cst_15 = arith.constant dense<0.000000e+00> : vector<16x32xf32>
    %63 = tpu.matmul %62, %2, %cst_15 {dimension_numbers = #tpu.dot_dimension_numbers<[1], [0], [0], [1], [0, 0, 1, 1], [], []>} : vector<16x32xf32>, vector<32x32xf32>, vector<16x32xf32> -> vector<16x32xf32>
    %64 = vector.broadcast %9 : vector<1x32xf32> to vector<16x32xf32>
    %65 = arith.addf %63, %64 : vector<16x32xf32>
    %66 = arith.addf %0, %65 : vector<16x32xf32>
    %cst_16 = arith.constant dense<0.000000e+00> : vector<16xf32>
    %67 = vector.multi_reduction <add>, %66, %cst_16 [1] : vector<16x32xf32> to vector<16xf32>
    %68 = vector.shape_cast %67 : vector<16xf32> to vector<16x1xf32>
    %cst_17 = arith.constant 3.125000e-02 : f32
    %69 = vector.broadcast %cst_17 : f32 to vector<16x1xf32>
    %70 = arith.mulf %68, %69 : vector<16x1xf32>
    %71 = arith.mulf %66, %66 : vector<16x32xf32>
    %cst_18 = arith.constant dense<0.000000e+00> : vector<16xf32>
    %72 = vector.multi_reduction <add>, %71, %cst_18 [1] : vector<16x32xf32> to vector<16xf32>
    %73 = vector.shape_cast %72 : vector<16xf32> to vector<16x1xf32>
    %cst_19 = arith.constant 3.125000e-02 : f32
    %74 = vector.broadcast %cst_19 : f32 to vector<16x1xf32>
    %75 = arith.mulf %73, %74 : vector<16x1xf32>
    %76 = arith.mulf %70, %70 : vector<16x1xf32>
    %77 = arith.subf %75, %76 : vector<16x1xf32>
    %78 = vector.broadcast %70 : vector<16x1xf32> to vector<16x32xf32>
    %79 = arith.subf %66, %78 : vector<16x32xf32>
    %cst_20 = arith.constant 9.99999974E-6 : f32
    %80 = vector.broadcast %cst_20 : f32 to vector<16x1xf32>
    %81 = arith.addf %77, %80 : vector<16x1xf32>
    %82 = math.rsqrt %81 : vector<16x1xf32>
    %83 = vector.broadcast %82 : vector<16x1xf32> to vector<16x32xf32>
    %84 = arith.mulf %79, %83 : vector<16x32xf32>
    %85 = vector.broadcast %12 : vector<1x32xf32> to vector<16x32xf32>
    %86 = arith.mulf %84, %85 : vector<16x32xf32>
    %87 = vector.broadcast %13 : vector<1x32xf32> to vector<16x32xf32>
    %88 = arith.addf %86, %87 : vector<16x32xf32>
    %cst_21 = arith.constant dense<0.000000e+00> : vector<16x64xf32>
    %89 = tpu.matmul %88, %3, %cst_21 {dimension_numbers = #tpu.dot_dimension_numbers<[1], [0], [0], [1], [0, 0, 1, 1], [], []>} : vector<16x32xf32>, vector<32x64xf32>, vector<16x64xf32> -> vector<16x64xf32>
    %90 = vector.broadcast %10 : vector<1x64xf32> to vector<16x64xf32>
    %91 = arith.addf %89, %90 : vector<16x64xf32>
    %cst_22 = arith.constant 0.000000e+00 : f32
    %92 = vector.broadcast %cst_22 : f32 to vector<16x64xf32>
    %93 = arith.maximumf %91, %92 : vector<16x64xf32>
    %cst_23 = arith.constant dense<0.000000e+00> : vector<16x32xf32>
    %94 = tpu.matmul %93, %4, %cst_23 {dimension_numbers = #tpu.dot_dimension_numbers<[1], [0], [0], [1], [0, 0, 1, 1], [], []>} : vector<16x64xf32>, vector<64x32xf32>, vector<16x32xf32> -> vector<16x32xf32>
    %95 = vector.broadcast %11 : vector<1x32xf32> to vector<16x32xf32>
    %96 = arith.addf %94, %95 : vector<16x32xf32>
    %97 = arith.addf %88, %96 : vector<16x32xf32>
    %cst_24 = arith.constant dense<0.000000e+00> : vector<16xf32>
    %98 = vector.multi_reduction <add>, %97, %cst_24 [1] : vector<16x32xf32> to vector<16xf32>
    %99 = vector.shape_cast %98 : vector<16xf32> to vector<16x1xf32>
    %cst_25 = arith.constant 3.125000e-02 : f32
    %100 = vector.broadcast %cst_25 : f32 to vector<16x1xf32>
    %101 = arith.mulf %99, %100 : vector<16x1xf32>
    %102 = arith.mulf %97, %97 : vector<16x32xf32>
    %cst_26 = arith.constant dense<0.000000e+00> : vector<16xf32>
    %103 = vector.multi_reduction <add>, %102, %cst_26 [1] : vector<16x32xf32> to vector<16xf32>
    %104 = vector.shape_cast %103 : vector<16xf32> to vector<16x1xf32>
    %cst_27 = arith.constant 3.125000e-02 : f32
    %105 = vector.broadcast %cst_27 : f32 to vector<16x1xf32>
    %106 = arith.mulf %104, %105 : vector<16x1xf32>
    %107 = arith.mulf %101, %101 : vector<16x1xf32>
    %108 = arith.subf %106, %107 : vector<16x1xf32>
    %109 = vector.broadcast %101 : vector<16x1xf32> to vector<16x32xf32>
    %110 = arith.subf %97, %109 : vector<16x32xf32>
    %cst_28 = arith.constant 9.99999974E-6 : f32
    %111 = vector.broadcast %cst_28 : f32 to vector<16x1xf32>
    %112 = arith.addf %108, %111 : vector<16x1xf32>
    %113 = math.rsqrt %112 : vector<16x1xf32>
    %114 = vector.broadcast %113 : vector<16x1xf32> to vector<16x32xf32>
    %115 = arith.mulf %110, %114 : vector<16x32xf32>
    %116 = vector.broadcast %14 : vector<1x32xf32> to vector<16x32xf32>
    %117 = arith.mulf %115, %116 : vector<16x32xf32>
    %118 = vector.broadcast %15 : vector<1x32xf32> to vector<16x32xf32>
    %119 = arith.addf %117, %118 : vector<16x32xf32>
    %c0_29 = arith.constant 0 : index
    %c0_30 = arith.constant 0 : index
    %120 = vector.load %arg4[%c0_29, %c0_30] : memref<16x32xf32, #tpu.memory_space<vmem>>, vector<16x32xf32>
    tpu.vector_store %arg4[%c0_29, %c0_30], %119 {strides = array<i32>} : memref<16x32xf32, #tpu.memory_space<vmem>>, vector<16x32xf32>,
    return
  }
  func.func @transform_0(%arg0: i32) -> (i32, i32) {
    %c0_i32 = arith.constant 0 : i32
    %c0_i32_0 = arith.constant 0 : i32
    %c0_i32_1 = arith.constant 0 : i32
    return %c0_i32, %c0_i32_0 : i32, i32
  }
  func.func @transform_1(%arg0: i32) -> (i32, i32) {
    %c0_i32 = arith.constant 0 : i32
    %c0_i32_0 = arith.constant 0 : i32
    %c0_i32_1 = arith.constant 0 : i32
    return %c0_i32, %c0_i32_0 : i32, i32
  }
  func.func @transform_2(%arg0: i32) -> (i32, i32) {
    %c0_i32 = arith.constant 0 : i32
    %c0_i32_0 = arith.constant 0 : i32
    %c0_i32_1 = arith.constant 0 : i32
    return %c0_i32, %c0_i32_0 : i32, i32
  }
  func.func @transform_3(%arg0: i32) -> (i32, i32) {
    %c0_i32 = arith.constant 0 : i32
    %c0_i32_0 = arith.constant 0 : i32
    %c0_i32_1 = arith.constant 0 : i32
    return %c0_i32, %c0_i32_0 : i32, i32
  }
}

</mosaic_0001>

<llo_original>
// kernel: tpu_custom_call.1
$region0: #{tpu_custom_call.1}
  #allocation0 [shape = 'u32[]', space=smem, size = 0x4, offset = 0x4, fixed_abs, tag = 'smem constant byte address 0x4 - core index']
  #allocation1 [shape = 'u32[144,128]{1,0:T(1,128)}', space=vmem, size = 0x12000, scoped, tag = 'internal scratch']
  %s0 = inlined_call_operand.hbm [shape: f32[16,32], index: 0, kind: input, shape index: {}]
  %s1 = inlined_call_operand.hbm [shape: f32[288,128], index: 1, kind: input, shape index: {}]
  %s2 = inlined_call_operand.hbm [shape: f32[8,128], index: 2, kind: input, shape index: {}]
  %s3 = inlined_call_operand.hbm [shape: f32[16,32], index: 3, kind: output, shape index: {}]
  %s4 = sld [smem:[#allocation0]]
  $region34: #{tpu_custom_call.1} parent=0
    _
  %s6 = ssub.s32 1, %s4
  %s7 = scalar_select 0, %s6, %s4
  $region1: #{tpu_custom_call.1} parent=0
    #allocation2 [shape = 'u8[8192]{0}', space=vmem, size = 0x2000, scoped, tag = 'input window, operand 0, single buffered']
    #allocation3 [shape = 's32[1]{0}', space=sflag, size = 0x4, scoped, tag = 'scoped memory for tpu_custom_call.1']
    #allocation4 [shape = 's32[1]{0}', space=sflag, size = 0x4, scoped, tag = 'scoped memory for tpu_custom_call.1']
    #allocation5 [shape = 'u8[147456]{0}', space=vmem, size = 0x24000, scoped, tag = 'input window, operand 1, single buffered']
    #allocation6 [shape = 's32[1]{0}', space=sflag, size = 0x4, scoped, tag = 'scoped memory for tpu_custom_call.1']
    #allocation7 [shape = 'u8[4096]{0}', space=vmem, size = 0x1000, scoped, tag = 'input window, operand 2, single buffered']
    #allocation8 [shape = 'u8[8192]{0}', space=vmem, size = 0x2000, scoped, tag = 'output window, operand 0, single buffered']
    %8 = vsyncpa [#allocation3], 0
    %9 = vsyncpa [#allocation6], 0
    %10 = vsyncpa [#allocation4], 0
    // Predicated region
    $region2: #{tpu_custom_call.1} parent=1 // pred_check
      _
    $region3: #{tpu_custom_call.1} parent=1 // pred_check_branch
      %12 = sbr.rel (0) target = $region5
    $region4: #{tpu_custom_call.1} parent=1 // pred_region
      %s14 = ssub.s32 256, 256
      %15 = vsyncadd [#allocation3], %s14
      %s16 = sshll.u32 [#allocation2], 4
      %s17 = int_to_ptr.vmem [resolvable:$true] %s16
      %22 = dma.hbm_to_vmem [thread:$0]  %s0, 256, %s17, [#allocation3], 128, 128, 8
    $region5: #{tpu_custom_call.1} parent=1 // pred_fallthru
      _
    // Predicated region
    $region6: #{tpu_custom_call.1} parent=1 // pred_check
      _
    $region7: #{tpu_custom_call.1} parent=1 // pred_check_branch
      %24 = sbr.rel (0) target = $region9
    $region8: #{tpu_custom_call.1} parent=1 // pred_region
      %s26 = ssub.s32 4608, 4608
      %27 = vsyncadd [#allocation6], %s26
      %s28 = sshll.u32 [#allocation5], 4
      %s29 = int_to_ptr.vmem [resolvable:$true] %s28
      %34 = dma.hbm_to_vmem [thread:$0]  %s1, 4608, %s29, [#allocation6], 128, 128, 8
    $region9: #{tpu_custom_call.1} parent=1 // pred_fallthru
      _
    // Predicated region
    $region10: #{tpu_custom_call.1} parent=1 // pred_check
      _
    $region11: #{tpu_custom_call.1} parent=1 // pred_check_branch
      %36 = sbr.rel (0) target = $region13
    $region12: #{tpu_custom_call.1} parent=1 // pred_region
      %s38 = ssub.s32 128, 128
      %39 = vsyncadd [#allocation6], %s38
      %s41 = sshll.u32 [#allocation7], 4
      %s42 = int_to_ptr.vmem [resolvable:$true] %s41
      %44 = dma.hbm_to_vmem [thread:$0]  %s2, 128, %s42, [#allocation6]
    $region13: #{tpu_custom_call.1} parent=1 // pred_fallthru
      _
    // Predicated region
    $region14: #{tpu_custom_call.1} parent=1 // pred_check
      _
    $region15: #{tpu_custom_call.1} parent=1 // pred_check_branch
      %46 = sbr.rel (0) target = $region17
    $region16: #{tpu_custom_call.1} parent=1 // pred_region
      %47 = dma.done [#allocation3], 256
    $region17: #{tpu_custom_call.1} parent=1 // pred_fallthru
      _
    // Predicated region
    $region18: #{tpu_custom_call.1} parent=1 // pred_check
      _
    $region19: #{tpu_custom_call.1} parent=1 // pred_check_branch
      %49 = sbr.rel (0) target = $region21
    $region20: #{tpu_custom_call.1} parent=1 // pred_region
      %50 = dma.done [#allocation6], 4608
    $region21: #{tpu_custom_call.1} parent=1 // pred_fallthru
      _
    // Predicated region
    $region22: #{tpu_custom_call.1} parent=1 // pred_check
      _
    $region23: #{tpu_custom_call.1} parent=1 // pred_check_branch
      %52 = sbr.rel (0) target = $region25
    $region24: #{tpu_custom_call.1} parent=1 // pred_region
      %53 = dma.done [#allocation6], 128
    $region25: #{tpu_custom_call.1} parent=1 // pred_fallthru
      _
    %v54 = vld [vmem:[#allocation2] sm:$0xff]
    %v55 = vld [vmem:[#allocation2 + $0x8] sm:$0xff]
    %v56 = vld [vmem:[#allocation5] sm:$0xff]
    %v57 = vld [vmem:[#allocation5 + $0x8] sm:$0xff]
    %v58 = vld [vmem:[#allocation5 + $0x10] sm:$0xff]
    %v59 = vld [vmem:[#allocation5 + $0x18] sm:$0xff]
    %v60 = vld [vmem:[#allocation5 + $0x20] sm:$0xff]
    %v61 = vld [vmem:[#allocation5 + $0x28] sm:$0xff]
    %v62 = vld [vmem:[#allocation5 + $0x30] sm:$0xff]
    %v63 = vld [vmem:[#allocation5 + $0x38] sm:$0xff]
    %v64 = vld [vmem:[#allocation5 + $0x40] sm:$0xff]
    %v65 = vld [vmem:[#allocation5 + $0x48] sm:$0xff]
    %v66 = vld [vmem:[#allocation5 + $0x50] sm:$0xff]
    %v67 = vld [vmem:[#allocation5 + $0x58] sm:$0xff]
    %v68 = vld [vmem:[#allocation5 + $0x60] sm:$0xff]
    %v69 = vld [vmem:[#allocation5 + $0x68] sm:$0xff]
    %v70 = vld [vmem:[#allocation5 + $0x70] sm:$0xff]
    %v71 = vld [vmem:[#allocation5 + $0x78] sm:$0xff]
    %v72 = vld [vmem:[#allocation5 + $0x80] sm:$0xff]
    %v73 = vld [vmem:[#allocation5 + $0x88] sm:$0xff]
    %v74 = vld [vmem:[#allocation5 + $0x90] sm:$0xff]
    %v75 = vld [vmem:[#allocation5 + $0x98] sm:$0xff]
    %v76 = vld [vmem:[#allocation5 + $0xa0] sm:$0xff]
    %v77 = vld [vmem:[#allocation5 + $0xa8] sm:$0xff]
    %v78 = vld [vmem:[#allocation5 + $0xb0] sm:$0xff]
    %v79 = vld [vmem:[#allocation5 + $0xb8] sm:$0xff]
    %v80 = vld [vmem:[#allocation5 + $0xc0] sm:$0xff]
    %v81 = vld [vmem:[#allocation5 + $0xc8] sm:$0xff]
    %v82 = vld [vmem:[#allocation5 + $0xd0] sm:$0xff]
    %v83 = vld [vmem:[#allocation5 + $0xd8] sm:$0xff]
    %v84 = vld [vmem:[#allocation5 + $0xe0] sm:$0xff]
    %v85 = vld [vmem:[#allocation5 + $0xe8] sm:$0xff]
    %v86 = vld [vmem:[#allocation5 + $0xf0] sm:$0xff]
    %v87 = vld [vmem:[#allocation5 + $0xf8] sm:$0xff]
    %v88 = vld [vmem:[#allocation5 + $0x100] sm:$0xff]
    %v89 = vld [vmem:[#allocation5 + $0x108] sm:$0xff]
    %v90 = vld [vmem:[#allocation5 + $0x110] sm:$0xff]
    %v91 = vld [vmem:[#allocation5 + $0x118] sm:$0xff]
    %v92 = vld [vmem:[#allocation7] sm:$0xff]
    %v93 = vlaneseq
    %v94 = vshrl.u32 %v93, 7
    %v95 = vsub.s32 0, %v94
    %v96 = vrot.slane %v92, %v95
    %vm97 = vcmask 261120
    %v99 = vsel %vm97, %v54, 0
    %v102 = vsel %vm97, %v55, 0
    %104 = vmatprep.subr.mxu0 0.0
    %105 = vmatpush1.msra.mxu0 %v56
    %106 = vmatprep.subr.mxu0 0.0
    %107 = vmatpush1.msra.mxu0 %v57
    %108 = vmatprep.subr.mxu0 0.0
    %109 = vmatpush1.msra.mxu0 %v58
    %110 = vmatprep.subr.mxu0 0.0
    %111 = vmatpush1.msra.mxu0 %v59
    %112 = vmatprep.subr.mxu0 0.0
    %113 = vmatpush1.msra.mxu0 0.0
    %114 = vmatprep.subr.mxu0 0.0
    %115 = vmatpush1.msra.mxu0 0.0
    %116 = vmatprep.subr.mxu0 0.0
    %117 = vmatpush1.msra.mxu0 0.0
    %118 = vmatprep.subr.mxu0 0.0
    %119 = vmatpush1.msra.mxu0 0.0
    %120 = vmatprep.subr.mxu0 0.0
    %121 = vmatpush1.msra.mxu0 0.0
    %122 = vmatprep.subr.mxu0 0.0
    %123 = vmatpush1.msra.mxu0 0.0
    %124 = vmatprep.subr.mxu0 0.0
    %125 = vmatpush1.msra.mxu0 0.0
    %126 = vmatprep.subr.mxu0 0.0
    %127 = vmatpush1.msra.mxu0 0.0
    %128 = vmatprep.subr.mxu0 0.0
    %129 = vmatpush1.msra.mxu0 0.0
    %130 = vmatprep.subr.mxu0 0.0
    %131 = vmatpush1.msra.mxu0 0.0
    %132 = vmatprep.subr.mxu0 0.0
    %133 = vmatpush1.msra.mxu0 0.0
    %134 = vmatprep.subr.mxu0 0.0
    %135 = vmatpush1.msra.mxu0 0.0
    %136 = vmatprep.subr.mxu0 0.0
    %137 = vmatpush1.msra.mxu0 0.0
    %138 = vmatprep.subr.mxu0 0.0
    %139 = vmatpush1.msra.mxu0 0.0
    %140 = vmatprep.subr.mxu0 0.0
    %141 = vmatpush1.msra.mxu0 0.0
    %142 = vmatprep.subr.mxu0 0.0
    %143 = vmatpush1.msra.mxu0 0.0
    %144 = vmatprep.subr.mxu0 0.0
    %145 = vmatpush1.msra.mxu0 0.0
    %146 = vmatprep.subr.mxu0 0.0
    %147 = vmatpush1.msra.mxu0 0.0
    %148 = vmatprep.subr.mxu0 0.0
    %149 = vmatpush1.msra.mxu0 0.0
    %150 = vmatprep.subr.mxu0 0.0
    %151 = vmatpush1.msra.mxu0 0.0
    %152 = vmatprep.subr.mxu0 0.0
    %153 = vmatpush1.msra.mxu0 0.0
    %154 = vmatprep.subr.mxu0 0.0
    %155 = vmatpush1.msra.mxu0 0.0
    %156 = vmatprep.subr.mxu0 0.0
    %157 = vmatpush1.msra.mxu0 0.0
    %158 = vmatprep.subr.mxu0 0.0
    %159 = vmatpush1.msra.mxu0 0.0
    %160 = vmatprep.subr.mxu0 0.0
    %161 = vmatpush1.msra.mxu0 0.0
    %162 = vmatprep.subr.mxu0 0.0
    %163 = vmatpush1.msra.mxu0 0.0
    %164 = vmatprep.subr.mxu0 0.0
    %165 = vmatpush1.msra.mxu0 0.0
    %166 = vmatprep.subr.mxu0 0.0
    %167 = vmatpush1.msra.mxu0 0.0
    %168 = vmatprep.mubr.f32.mxu0 0.0
    %169 = vmatmul.mubr.f32.gmra.mrb[0].mxu0 %v99
    %v170 = vpop.f32.mrb[0].mxu0
    %v171 = vadd.f32 %v96, %v170
    %v172 = vpop.f32.mrb[0].mxu0
    %173 = vmatprep.mubr.f32.mxu0 0.0
    %174 = vmatmul.mubr.f32.gmra.mrb[0].mxu0 %v102
    %v175 = vpop.f32.mrb[0].mxu0
    %v176 = vadd.f32 %v96, %v175
    %v177 = vpop.f32.mrb[0].mxu0
    %178 = vdwg.mxu0
    %v179 = vmul.f32 %v171, %v76
    %v180 = vmul.f32 %v171, %v77
    %v181 = vmul.f32 %v171, %v78
    %v182 = vmul.f32 %v171, %v79
    %v183 = vmul.f32 %v176, %v80
    %v184 = vmul.f32 %v176, %v81
    %v185 = vmul.f32 %v176, %v82
    %v186 = vmul.f32 %v176, %v83
    %189 = vrot.lane.b32.xlu0 %v171, 96
    %v190 = vpop.permute.xlu0 %189
    %191 = vrot.lane.b32.xlu0 %v176, 96
    %v192 = vpop.permute.xlu0 %191
    %v194 = vsel %vm97, %v179, 0
    %v197 = vsel %vm97, %v180, 0
    %v200 = vsel %vm97, %v181, 0
    %v203 = vsel %vm97, %v182, 0
    %v206 = vsel %vm97, %v183, 0
    %v209 = vsel %vm97, %v184, 0
    %v212 = vsel %vm97, %v185, 0
    %v215 = vsel %vm97, %v186, 0
    %v217 = vsel %vm97, %v190, 0
    %v219 = vsel %vm97, %v192, 0
    %221 = vmatprep.subr.mxu0 0.0
    %222 = vmatpush1.xpose.msra.mxu0 %v217
    %223 = vmatprep.subr.mxu0 0.0
    %224 = vmatpush1.xpose.msra.mxu0 %v219
    %225 = vmatprep.subr.mxu0 0.0
    %226 = vmatpush1.xpose.msra.mxu0 0.0
    %227 = vmatprep.subr.mxu0 0.0
    %228 = vmatpush1.xpose.msra.mxu0 0.0
    %229 = vmatprep.subr.mxu0 0.0
    %230 = vmatpush1.xpose.msra.mxu0 0.0
    %231 = vmatprep.subr.mxu0 0.0
    %232 = vmatpush1.xpose.msra.mxu0 0.0
    %233 = vmatprep.subr.mxu0 0.0
    %234 = vmatpush1.xpose.msra.mxu0 0.0
    %235 = vmatprep.subr.mxu0 0.0
    %236 = vmatpush1.xpose.msra.mxu0 0.0
    %237 = vmatprep.subr.mxu0 0.0
    %238 = vmatpush1.xpose.msra.mxu0 0.0
    %239 = vmatprep.subr.mxu0 0.0
    %240 = vmatpush1.xpose.msra.mxu0 0.0
    %241 = vmatprep.subr.mxu0 0.0
    %242 = vmatpush1.xpose.msra.mxu0 0.0
    %243 = vmatprep.subr.mxu0 0.0
    %244 = vmatpush1.xpose.msra.mxu0 0.0
    %245 = vmatprep.subr.mxu0 0.0
    %246 = vmatpush1.xpose.msra.mxu0 0.0
    %247 = vmatprep.subr.mxu0 0.0
    %248 = vmatpush1.xpose.msra.mxu0 0.0
    %249 = vmatprep.subr.mxu0 0.0
    %250 = vmatpush1.xpose.msra.mxu0 0.0
    %251 = vmatprep.subr.mxu0 0.0
    %252 = vmatpush1.xpose.msra.mxu0 0.0
    %253 = vmatprep.subr.mxu0 0.0
    %254 = vmatpush1.xpose.msra.mxu0 0.0
    %255 = vmatprep.subr.mxu0 0.0
    %256 = vmatpush1.xpose.msra.mxu0 0.0
    %257 = vmatprep.subr.mxu0 0.0
    %258 = vmatpush1.xpose.msra.mxu0 0.0
    %259 = vmatprep.subr.mxu0 0.0
    %260 = vmatpush1.xpose.msra.mxu0 0.0
    %261 = vmatprep.subr.mxu0 0.0
    %262 = vmatpush1.xpose.msra.mxu0 0.0
    %263 = vmatprep.subr.mxu0 0.0
    %264 = vmatpush1.xpose.msra.mxu0 0.0
    %265 = vmatprep.subr.mxu0 0.0
    %266 = vmatpush1.xpose.msra.mxu0 0.0
    %267 = vmatprep.subr.mxu0 0.0
    %268 = vmatpush1.xpose.msra.mxu0 0.0
    %269 = vmatprep.subr.mxu0 0.0
    %270 = vmatpush1.xpose.msra.mxu0 0.0
    %271 = vmatprep.subr.mxu0 0.0
    %272 = vmatpush1.xpose.msra.mxu0 0.0
    %273 = vmatprep.subr.mxu0 0.0
    %274 = vmatpush1.xpose.msra.mxu0 0.0
    %275 = vmatprep.subr.mxu0 0.0
    %276 = vmatpush1.xpose.msra.mxu0 0.0
    %277 = vmatprep.subr.mxu0 0.0
    %278 = vmatpush1.xpose.msra.mxu0 0.0
    %279 = vmatprep.subr.mxu0 0.0
    %280 = vmatpush1.xpose.msra.mxu0 0.0
    %281 = vmatprep.subr.mxu0 0.0
    %282 = vmatpush1.xpose.msra.mxu0 0.0
    %283 = vmatprep.subr.mxu0 0.0
    %284 = vmatpush1.xpose.msra.mxu0 0.0
    %285 = vmatprep.mubr.f32.mxu0 0.0
    %286 = vmatmul.mubr.f32.gmra.mrb[0].mxu0 %v194
    %v287 = vpop.f32.mrb[0].mxu0
    %v288 = vadd.f32 0.0, %v287
    %v289 = vpop.f32.mrb[0].mxu0
    %290 = vmatprep.mubr.f32.mxu0 0.0
    %291 = vmatmul.mubr.f32.gmra.mrb[0].mxu0 %v197
    %v292 = vpop.f32.mrb[0].mxu0
    %v293 = vadd.f32 0.0, %v292
    %v294 = vpop.f32.mrb[0].mxu0
    %295 = vmatprep.mubr.f32.mxu0 0.0
    %296 = vmatmul.mubr.f32.gmra.mrb[0].mxu0 %v200
    %v297 = vpop.f32.mrb[0].mxu0
    %v298 = vadd.f32 0.0, %v297
    %v299 = vpop.f32.mrb[0].mxu0
    %300 = vmatprep.mubr.f32.mxu0 0.0
    %301 = vmatmul.mubr.f32.gmra.mrb[0].mxu0 %v203
    %v302 = vpop.f32.mrb[0].mxu0
    %v303 = vadd.f32 0.0, %v302
    %v304 = vpop.f32.mrb[0].mxu0
    %305 = vmatprep.mubr.f32.mxu0 0.0
    %306 = vmatmul.mubr.f32.gmra.mrb[0].mxu0 %v206
    %v307 = vpop.f32.mrb[0].mxu0
    %v308 = vadd.f32 0.0, %v307
    %v309 = vpop.f32.mrb[0].mxu0
    %310 = vmatprep.mubr.f32.mxu0 0.0
    %311 = vmatmul.mubr.f32.gmra.mrb[0].mxu0 %v209
    %v312 = vpop.f32.mrb[0].mxu0
    %v313 = vadd.f32 0.0, %v312
    %v314 = vpop.f32.mrb[0].mxu0
    %315 = vmatprep.mubr.f32.mxu0 0.0
    %316 = vmatmul.mubr.f32.gmra.mrb[0].mxu0 %v212
    %v317 = vpop.f32.mrb[0].mxu0
    %v318 = vadd.f32 0.0, %v317
    %v319 = vpop.f32.mrb[0].mxu0
    %320 = vmatprep.mubr.f32.mxu0 0.0
    %321 = vmatmul.mubr.f32.gmra.mrb[0].mxu0 %v215
    %v322 = vpop.f32.mrb[0].mxu0
    %v323 = vadd.f32 0.0, %v322
    %v324 = vpop.f32.mrb[0].mxu0
    %325 = vdwg.mxu0
    %v326 = vmul.f32 %v288, 0.35355338
    %v327 = vmul.f32 %v293, 0.35355338
    %v328 = vmul.f32 %v298, 0.35355338
    %v329 = vmul.f32 %v303, 0.35355338
    %v330 = vmul.f32 %v308, 0.35355338
    %v331 = vmul.f32 %v313, 0.35355338
    %v332 = vmul.f32 %v318, 0.35355338
    %v333 = vmul.f32 %v323, 0.35355338
    %v334 = vadd.f32 %v326, %v84
    %v335 = vadd.f32 %v327, %v85
    %v336 = vadd.f32 %v328, %v86
    %v337 = vadd.f32 %v329, %v87
    %v338 = vadd.f32 %v330, %v88
    %v339 = vadd.f32 %v331, %v89
    %v340 = vadd.f32 %v332, %v90
    %v341 = vadd.f32 %v333, %v91
    %vm342 = vcmask 130048
    %v343 = vsel %vm342, %v334, -inf
    %344 = vmax.xlane.f32.xlu0 %v343
    %v345 = vpop.xlane.xlu0 %344
    %v346 = vsel %vm342, %v335, -inf
    %347 = vmax.xlane.f32.xlu0 %v346
    %v348 = vpop.xlane.xlu0 %347
    %v349 = vsel %vm342, %v336, -inf
    %350 = vmax.xlane.f32.xlu0 %v349
    %v351 = vpop.xlane.xlu0 %350
    %v352 = vsel %vm342, %v337, -inf
    %353 = vmax.xlane.f32.xlu0 %v352
    %v354 = vpop.xlane.xlu0 %353
    %v355 = vsel %vm342, %v338, -inf
    %356 = vmax.xlane.f32.xlu0 %v355
    %v357 = vpop.xlane.xlu0 %356
    %v358 = vsel %vm342, %v339, -inf
    %359 = vmax.xlane.f32.xlu0 %v358
    %v360 = vpop.xlane.xlu0 %359
    %v361 = vsel %vm342, %v340, -inf
    %362 = vmax.xlane.f32.xlu0 %v361
    %v363 = vpop.xlane.xlu0 %362
    %v364 = vsel %vm342, %v341, -inf
    %365 = vmax.xlane.f32.xlu0 %v364
    %v366 = vpop.xlane.xlu0 %365
    %v367 = vsub.f32 %v334, %v345
    %v368 = vsub.f32 %v335, %v348
    %v369 = vsub.f32 %v336, %v351
    %v370 = vsub.f32 %v337, %v354
    %v371 = vsub.f32 %v338, %v357
    %v372 = vsub.f32 %v339, %v360
    %v373 = vsub.f32 %v340, %v363
    %v374 = vsub.f32 %v341, %v366
    %v375 = vmul.f32 %v367, 1.442695
    %v376 = vpow.pop %v375
    %v377 = vmul.f32 %v368, 1.442695
    %v378 = vpow.pop %v377
    %v379 = vmul.f32 %v369, 1.442695
    %v380 = vpow.pop %v379
    %v381 = vmul.f32 %v370, 1.442695
    %v382 = vpow.pop %v381
    %v383 = vmul.f32 %v371, 1.442695
    %v384 = vpow.pop %v383
    %v385 = vmul.f32 %v372, 1.442695
    %v386 = vpow.pop %v385
    %v387 = vmul.f32 %v373, 1.442695
    %v388 = vpow.pop %v387
    %v389 = vmul.f32 %v374, 1.442695
    %v390 = vpow.pop %v389
    %v391 = vsel %vm342, %v376, 0.0
    %392 = vadd.xlane.f32.xlu0 %v391
    %v393 = vpop.xlane.xlu0 %392
    %v394 = vsel %vm342, %v378, 0.0
    %395 = vadd.xlane.f32.xlu0 %v394
    %v396 = vpop.xlane.xlu0 %395
    %v397 = vsel %vm342, %v380, 0.0
    %398 = vadd.xlane.f32.xlu0 %v397
    %v399 = vpop.xlane.xlu0 %398
    %v400 = vsel %vm342, %v382, 0.0
    %401 = vadd.xlane.f32.xlu0 %v400
    %v402 = vpop.xlane.xlu0 %401
    %v403 = vsel %vm342, %v384, 0.0
    %404 = vadd.xlane.f32.xlu0 %v403
    %v405 = vpop.xlane.xlu0 %404
    %v406 = vsel %vm342, %v386, 0.0
    %407 = vadd.xlane.f32.xlu0 %v406
    %v408 = vpop.xlane.xlu0 %407
    %v409 = vsel %vm342, %v388, 0.0
    %410 = vadd.xlane.f32.xlu0 %v409
    %v411 = vpop.xlane.xlu0 %410
    %v412 = vsel %vm342, %v390, 0.0
    %413 = vadd.xlane.f32.xlu0 %v412
    %v414 = vpop.xlane.xlu0 %413
    %v415 = vrcp.pop %v393
    %v416 = vrcp.pop %v396
    %v417 = vrcp.pop %v399
    %v418 = vrcp.pop %v402
    %v419 = vrcp.pop %v405
    %v420 = vrcp.pop %v408
    %v421 = vrcp.pop %v411
    %v422 = vrcp.pop %v414
    %v423 = vmul.f32 %v376, %v415
    %v424 = vmul.f32 %v378, %v416
    %v425 = vmul.f32 %v380, %v417
    %v426 = vmul.f32 %v382, %v418
    %v427 = vmul.f32 %v384, %v419
    %v428 = vmul.f32 %v386, %v420
    %v429 = vmul.f32 %v388, %v421
    %v430 = vmul.f32 %v390, %v422
    %431 = vrot.lane.b32.xlu0 %v171, 64
    %v432 = vpop.permute.xlu0 %431
    %433 = vrot.lane.b32.xlu0 %v176, 64
    %v434 = vpop.permute.xlu0 %433
    %v438 = vsel %vm342, %v423, 0
    %v441 = vsel %vm342, %v424, 0
    %v444 = vsel %vm342, %v425, 0
    %v447 = vsel %vm342, %v426, 0
    %v450 = vsel %vm342, %v427, 0
    %v453 = vsel %vm342, %v428, 0
    %v456 = vsel %vm342, %v429, 0
    %v459 = vsel %vm342, %v430, 0
    %461 = vmatprep.subr.mxu0 0.0
    %462 = vmatpush1.msra.mxu0 %v432
    %463 = vmatprep.subr.mxu0 0.0
    %464 = vmatpush1.msra.mxu0 %v434
    %465 = vmatprep.subr.mxu0 0.0
    %466 = vmatpush1.msra.mxu0 0.0
    %467 = vmatprep.subr.mxu0 0.0
    %468 = vmatpush1.msra.mxu0 0.0
    %469 = vmatprep.subr.mxu0 0.0
    %470 = vmatpush1.msra.mxu0 0.0
    %471 = vmatprep.subr.mxu0 0.0
    %472 = vmatpush1.msra.mxu0 0.0
    %473 = vmatprep.subr.mxu0 0.0
    %474 = vmatpush1.msra.mxu0 0.0
    %475 = vmatprep.subr.mxu0 0.0
    %476 = vmatpush1.msra.mxu0 0.0
    %477 = vmatprep.subr.mxu0 0.0
    %478 = vmatpush1.msra.mxu0 0.0
    %479 = vmatprep.subr.mxu0 0.0
    %480 = vmatpush1.msra.mxu0 0.0
    %481 = vmatprep.subr.mxu0 0.0
    %482 = vmatpush1.msra.mxu0 0.0
    %483 = vmatprep.subr.mxu0 0.0
    %484 = vmatpush1.msra.mxu0 0.0
    %485 = vmatprep.subr.mxu0 0.0
    %486 = vmatpush1.msra.mxu0 0.0
    %487 = vmatprep.subr.mxu0 0.0
    %488 = vmatpush1.msra.mxu0 0.0
    %489 = vmatprep.subr.mxu0 0.0
    %490 = vmatpush1.msra.mxu0 0.0
    %491 = vmatprep.subr.mxu0 0.0
    %492 = vmatpush1.msra.mxu0 0.0
    %493 = vmatprep.subr.mxu0 0.0
    %494 = vmatpush1.msra.mxu0 0.0
    %495 = vmatprep.subr.mxu0 0.0
    %496 = vmatpush1.msra.mxu0 0.0
    %497 = vmatprep.subr.mxu0 0.0
    %498 = vmatpush1.msra.mxu0 0.0
    %499 = vmatprep.subr.mxu0 0.0
    %500 = vmatpush1.msra.mxu0 0.0
    %501 = vmatprep.subr.mxu0 0.0
    %502 = vmatpush1.msra.mxu0 0.0
    %503 = vmatprep.subr.mxu0 0.0
    %504 = vmatpush1.msra.mxu0 0.0
    %505 = vmatprep.subr.mxu0 0.0
    %506 = vmatpush1.msra.mxu0 0.0
    %507 = vmatprep.subr.mxu0 0.0
    %508 = vmatpush1.msra.mxu0 0.0
    %509 = vmatprep.subr.mxu0 0.0
    %510 = vmatpush1.msra.mxu0 0.0
    %511 = vmatprep.subr.mxu0 0.0
    %512 = vmatpush1.msra.mxu0 0.0
    %513 = vmatprep.subr.mxu0 0.0
    %514 = vmatpush1.msra.mxu0 0.0
    %515 = vmatprep.subr.mxu0 0.0
    %516 = vmatpush1.msra.mxu0 0.0
    %517 = vmatprep.subr.mxu0 0.0
    %518 = vmatpush1.msra.mxu0 0.0
    %519 = vmatprep.subr.mxu0 0.0
    %520 = vmatpush1.msra.mxu0 0.0
    %521 = vmatprep.subr.mxu0 0.0
    %522 = vmatpush1.msra.mxu0 0.0
    %523 = vmatprep.subr.mxu0 0.0
    %524 = vmatpush1.msra.mxu0 0.0
    %525 = vmatprep.mubr.f32.mxu0 0.0
    %526 = vmatmul.mubr.f32.gmra.mrb[0].mxu0 %v438
    %v527 = vpop.f32.mrb[0].mxu0
    %v528 = vadd.f32 0.0, %v527
    %v529 = vpop.f32.mrb[0].mxu0
    %530 = vmatprep.mubr.f32.mxu0 0.0
    %531 = vmatmul.mubr.f32.gmra.mrb[0].mxu0 %v441
    %v532 = vpop.f32.mrb[0].mxu0
    %v533 = vadd.f32 0.0, %v532
    %v534 = vpop.f32.mrb[0].mxu0
    %535 = vmatprep.mubr.f32.mxu0 0.0
    %536 = vmatmul.mubr.f32.gmra.mrb[0].mxu0 %v444
    %v537 = vpop.f32.mrb[0].mxu0
    %v538 = vadd.f32 0.0, %v537
    %v539 = vpop.f32.mrb[0].mxu0
    %540 = vmatprep.mubr.f32.mxu0 0.0
    %541 = vmatmul.mubr.f32.gmra.mrb[0].mxu0 %v447
    %v542 = vpop.f32.mrb[0].mxu0
    %v543 = vadd.f32 0.0, %v542
    %v544 = vpop.f32.mrb[0].mxu0
    %545 = vmatprep.mubr.f32.mxu0 0.0
    %546 = vmatmul.mubr.f32.gmra.mrb[0].mxu0 %v450
    %v547 = vpop.f32.mrb[0].mxu0
    %v548 = vadd.f32 0.0, %v547
    %v549 = vpop.f32.mrb[0].mxu0
    %550 = vmatprep.mubr.f32.mxu0 0.0
    %551 = vmatmul.mubr.f32.gmra.mrb[0].mxu0 %v453
    %v552 = vpop.f32.mrb[0].mxu0
    %v553 = vadd.f32 0.0, %v552
    %v554 = vpop.f32.mrb[0].mxu0
    %555 = vmatprep.mubr.f32.mxu0 0.0
    %556 = vmatmul.mubr.f32.gmra.mrb[0].mxu0 %v456
    %v557 = vpop.f32.mrb[0].mxu0
    %v558 = vadd.f32 0.0, %v557
    %v559 = vpop.f32.mrb[0].mxu0
    %560 = vmatprep.mubr.f32.mxu0 0.0
    %561 = vmatmul.mubr.f32.gmra.mrb[0].mxu0 %v459
    %v562 = vpop.f32.mrb[0].mxu0
    %v563 = vadd.f32 0.0, %v562
    %v564 = vpop.f32.mrb[0].mxu0
    %565 = vdwg.mxu0
    %v566 = vmul.f32 %v528, %v76
    %v567 = vmul.f32 %v533, %v77
    %v568 = vmul.f32 %v538, %v78
    %v569 = vmul.f32 %v543, %v79
    %v570 = vmul.f32 %v548, %v80
    %v571 = vmul.f32 %v553, %v81
    %v572 = vmul.f32 %v558, %v82
    %v573 = vmul.f32 %v563, %v83
    %v574 = vadd.f32 %v566, %v567
    %v575 = vadd.f32 %v574, %v568
    %v576 = vadd.f32 %v575, %v569
    %v577 = vadd.f32 %v570, %v571
    %v578 = vadd.f32 %v577, %v572
    %v579 = vadd.f32 %v578, %v573
    %v580 = vlaneseq
    %v581 = vshrl.u32 %v580, 7
    %v582 = vsub.s32 1, %v581
    %v583 = vrot.slane %v92, %v582
    %v585 = vsel %vm97, %v576, 0
    %v588 = vsel %vm97, %v579, 0
    %590 = vmatprep.subr.mxu0 0.0
    %591 = vmatpush1.msra.mxu0 %v60
    %592 = vmatprep.subr.mxu0 0.0
    %593 = vmatpush1.msra.mxu0 %v61
    %594 = vmatprep.subr.mxu0 0.0
    %595 = vmatpush1.msra.mxu0 %v62
    %596 = vmatprep.subr.mxu0 0.0
    %597 = vmatpush1.msra.mxu0 %v63
    %598 = vmatprep.subr.mxu0 0.0
    %599 = vmatpush1.msra.mxu0 0.0
    %600 = vmatprep.subr.mxu0 0.0
    %601 = vmatpush1.msra.mxu0 0.0
    %602 = vmatprep.subr.mxu0 0.0
    %603 = vmatpush1.msra.mxu0 0.0
    %604 = vmatprep.subr.mxu0 0.0
    %605 = vmatpush1.msra.mxu0 0.0
    %606 = vmatprep.subr.mxu0 0.0
    %607 = vmatpush1.msra.mxu0 0.0
    %608 = vmatprep.subr.mxu0 0.0
    %609 = vmatpush1.msra.mxu0 0.0
    %610 = vmatprep.subr.mxu0 0.0
    %611 = vmatpush1.msra.mxu0 0.0
    %612 = vmatprep.subr.mxu0 0.0
    %613 = vmatpush1.msra.mxu0 0.0
    %614 = vmatprep.subr.mxu0 0.0
    %615 = vmatpush1.msra.mxu0 0.0
    %616 = vmatprep.subr.mxu0 0.0
    %617 = vmatpush1.msra.mxu0 0.0
    %618 = vmatprep.subr.mxu0 0.0
    %619 = vmatpush1.msra.mxu0 0.0
    %620 = vmatprep.subr.mxu0 0.0
    %621 = vmatpush1.msra.mxu0 0.0
    %622 = vmatprep.subr.mxu0 0.0
    %623 = vmatpush1.msra.mxu0 0.0
    %624 = vmatprep.subr.mxu0 0.0
    %625 = vmatpush1.msra.mxu0 0.0
    %626 = vmatprep.subr.mxu0 0.0
    %627 = vmatpush1.msra.mxu0 0.0
    %628 = vmatprep.subr.mxu0 0.0
    %629 = vmatpush1.msra.mxu0 0.0
    %630 = vmatprep.subr.mxu0 0.0
    %631 = vmatpush1.msra.mxu0 0.0
    %632 = vmatprep.subr.mxu0 0.0
    %633 = vmatpush1.msra.mxu0 0.0
    %634 = vmatprep.subr.mxu0 0.0
    %635 = vmatpush1.msra.mxu0 0.0
    %636 = vmatprep.subr.mxu0 0.0
    %637 = vmatpush1.msra.mxu0 0.0
    %638 = vmatprep.subr.mxu0 0.0
    %639 = vmatpush1.msra.mxu0 0.0
    %640 = vmatprep.subr.mxu0 0.0
    %641 = vmatpush1.msra.mxu0 0.0
    %642 = vmatprep.subr.mxu0 0.0
    %643 = vmatpush1.msra.mxu0 0.0
    %644 = vmatprep.subr.mxu0 0.0
    %645 = vmatpush1.msra.mxu0 0.0
    %646 = vmatprep.subr.mxu0 0.0
    %647 = vmatpush1.msra.mxu0 0.0
    %648 = vmatprep.subr.mxu0 0.0
    %649 = vmatpush1.msra.mxu0 0.0
    %650 = vmatprep.subr.mxu0 0.0
    %651 = vmatpush1.msra.mxu0 0.0
    %652 = vmatprep.subr.mxu0 0.0
    %653 = vmatpush1.msra.mxu0 0.0
    %654 = vmatprep.mubr.f32.mxu0 0.0
    %655 = vmatmul.mubr.f32.gmra.mrb[0].mxu0 %v585
    %v656 = vpop.f32.mrb[0].mxu0
    %v657 = vadd.f32 %v583, %v656
    %v658 = vpop.f32.mrb[0].mxu0
    %659 = vmatprep.mubr.f32.mxu0 0.0
    %660 = vmatmul.mubr.f32.gmra.mrb[0].mxu0 %v588
    %v661 = vpop.f32.mrb[0].mxu0
    %v662 = vadd.f32 %v583, %v661
    %v663 = vpop.f32.mrb[0].mxu0
    %664 = vdwg.mxu0
    %v665 = vadd.f32 %v54, %v657
    %v666 = vadd.f32 %v55, %v662
    %v667 = vsel %vm97, %v665, 0.0
    %668 = vadd.xlane.f32.xlu0 %v667
    %v669 = vpop.xlane.xlu0 %668
    %v670 = vsel %vm97, %v666, 0.0
    %671 = vadd.xlane.f32.xlu0 %v670
    %v672 = vpop.xlane.xlu0 %671
    %v673 = vmul.f32 %v669, 0.03125
    %v674 = vmul.f32 %v672, 0.03125
    %v675 = vmul.f32 %v665, %v665
    %v676 = vmul.f32 %v666, %v666
    %v677 = vsel %vm97, %v675, 0.0
    %678 = vadd.xlane.f32.xlu0 %v677
    %v679 = vpop.xlane.xlu0 %678
    %v680 = vsel %vm97, %v676, 0.0
    %681 = vadd.xlane.f32.xlu0 %v680
    %v682 = vpop.xlane.xlu0 %681
    %v683 = vmul.f32 %v679, 0.03125
    %v684 = vmul.f32 %v682, 0.03125
    %v685 = vmul.f32 %v673, %v673
    %v686 = vmul.f32 %v674, %v674
    %v687 = vsub.f32 %v683, %v685
    %v688 = vsub.f32 %v684, %v686
    %v689 = vsub.f32 %v665, %v673
    %v690 = vsub.f32 %v666, %v674
    %v691 = vadd.f32 %v687, 1e-05
    %v692 = vadd.f32 %v688, 1e-05
    %v693 = vrsqrt.pop %v691
    %v694 = vrsqrt.pop %v692
    %v695 = vmul.f32 %v689, %v693
    %v696 = vmul.f32 %v690, %v694
    %v697 = vlaneseq
    %v698 = vshrl.u32 %v697, 7
    %v699 = vsub.s32 4, %v698
    %v700 = vrot.slane %v92, %v699
    %v701 = vmul.f32 %v695, %v700
    %v702 = vmul.f32 %v696, %v700
    %v703 = vlaneseq
    %v704 = vshrl.u32 %v703, 7
    %v705 = vsub.s32 5, %v704
    %v706 = vrot.slane %v92, %v705
    %v707 = vadd.f32 %v701, %v706
    %v708 = vadd.f32 %v702, %v706
    %v709 = vlaneseq
    %v710 = vshrl.u32 %v709, 7
    %v711 = vsub.s32 2, %v710
    %v712 = vrot.slane %v92, %v711
    %v714 = vsel %vm97, %v707, 0
    %v717 = vsel %vm97, %v708, 0
    %719 = vmatprep.subr.mxu0 0.0
    %720 = vmatpush1.msra.mxu0 %v64
    %721 = vmatprep.subr.mxu0 0.0
    %722 = vmatpush1.msra.mxu0 %v65
    %723 = vmatprep.subr.mxu0 0.0
    %724 = vmatpush1.msra.mxu0 %v66
    %725 = vmatprep.subr.mxu0 0.0
    %726 = vmatpush1.msra.mxu0 %v67
    %727 = vmatprep.subr.mxu0 0.0
    %728 = vmatpush1.msra.mxu0 0.0
    %729 = vmatprep.subr.mxu0 0.0
    %730 = vmatpush1.msra.mxu0 0.0
    %731 = vmatprep.subr.mxu0 0.0
    %732 = vmatpush1.msra.mxu0 0.0
    %733 = vmatprep.subr.mxu0 0.0
    %734 = vmatpush1.msra.mxu0 0.0
    %735 = vmatprep.subr.mxu0 0.0
    %736 = vmatpush1.msra.mxu0 0.0
    %737 = vmatprep.subr.mxu0 0.0
    %738 = vmatpush1.msra.mxu0 0.0
    %739 = vmatprep.subr.mxu0 0.0
    %740 = vmatpush1.msra.mxu0 0.0
    %741 = vmatprep.subr.mxu0 0.0
    %742 = vmatpush1.msra.mxu0 0.0
    %743 = vmatprep.subr.mxu0 0.0
    %744 = vmatpush1.msra.mxu0 0.0
    %745 = vmatprep.subr.mxu0 0.0
    %746 = vmatpush1.msra.mxu0 0.0
    %747 = vmatprep.subr.mxu0 0.0
    %748 = vmatpush1.msra.mxu0 0.0
    %749 = vmatprep.subr.mxu0 0.0
    %750 = vmatpush1.msra.mxu0 0.0
    %751 = vmatprep.subr.mxu0 0.0
    %752 = vmatpush1.msra.mxu0 0.0
    %753 = vmatprep.subr.mxu0 0.0
    %754 = vmatpush1.msra.mxu0 0.0
    %755 = vmatprep.subr.mxu0 0.0
    %756 = vmatpush1.msra.mxu0 0.0
    %757 = vmatprep.subr.mxu0 0.0
    %758 = vmatpush1.msra.mxu0 0.0
    %759 = vmatprep.subr.mxu0 0.0
    %760 = vmatpush1.msra.mxu0 0.0
    %761 = vmatprep.subr.mxu0 0.0
    %762 = vmatpush1.msra.mxu0 0.0
    %763 = vmatprep.subr.mxu0 0.0
    %764 = vmatpush1.msra.mxu0 0.0
    %765 = vmatprep.subr.mxu0 0.0
    %766 = vmatpush1.msra.mxu0 0.0
    %767 = vmatprep.subr.mxu0 0.0
    %768 = vmatpush1.msra.mxu0 0.0
    %769 = vmatprep.subr.mxu0 0.0
    %770 = vmatpush1.msra.mxu0 0.0
    %771 = vmatprep.subr.mxu0 0.0
    %772 = vmatpush1.msra.mxu0 0.0
    %773 = vmatprep.subr.mxu0 0.0
    %774 = vmatpush1.msra.mxu0 0.0
    %775 = vmatprep.subr.mxu0 0.0
    %776 = vmatpush1.msra.mxu0 0.0
    %777 = vmatprep.subr.mxu0 0.0
    %778 = vmatpush1.msra.mxu0 0.0
    %779 = vmatprep.subr.mxu0 0.0
    %780 = vmatpush1.msra.mxu0 0.0
    %781 = vmatprep.subr.mxu0 0.0
    %782 = vmatpush1.msra.mxu0 0.0
    %783 = vmatprep.mubr.f32.mxu0 0.0
    %784 = vmatmul.mubr.f32.gmra.mrb[0].mxu0 %v714
    %v785 = vpop.f32.mrb[0].mxu0
    %v786 = vadd.f32 %v712, %v785
    %v787 = vpop.f32.mrb[0].mxu0
    %788 = vmatprep.mubr.f32.mxu0 0.0
    %789 = vmatmul.mubr.f32.gmra.mrb[0].mxu0 %v717
    %v790 = vpop.f32.mrb[0].mxu0
    %v791 = vadd.f32 %v712, %v790
    %v792 = vpop.f32.mrb[0].mxu0
    %793 = vdwg.mxu0
    %v794 = vmax.f32 %v786, 0.0
    %v795 = vmax.f32 %v791, 0.0
    %v796 = vlaneseq
    %v797 = vshrl.u32 %v796, 7
    %v798 = vsub.s32 3, %v797
    %v799 = vrot.slane %v92, %v798
    %vm800 = vcmask 523264
    %v802 = vsel %vm800, %v794, 0
    %v805 = vsel %vm800, %v795, 0
    %807 = vmatprep.subr.mxu0 0.0
    %808 = vmatpush1.msra.mxu0 %v68
    %809 = vmatprep.subr.mxu0 0.0
    %810 = vmatpush1.msra.mxu0 %v69
    %811 = vmatprep.subr.mxu0 0.0
    %812 = vmatpush1.msra.mxu0 %v70
    %813 = vmatprep.subr.mxu0 0.0
    %814 = vmatpush1.msra.mxu0 %v71
    %815 = vmatprep.subr.mxu0 0.0
    %816 = vmatpush1.msra.mxu0 %v72
    %817 = vmatprep.subr.mxu0 0.0
    %818 = vmatpush1.msra.mxu0 %v73
    %819 = vmatprep.subr.mxu0 0.0
    %820 = vmatpush1.msra.mxu0 %v74
    %821 = vmatprep.subr.mxu0 0.0
    %822 = vmatpush1.msra.mxu0 %v75
    %823 = vmatprep.subr.mxu0 0.0
    %824 = vmatpush1.msra.mxu0 0.0
    %825 = vmatprep.subr.mxu0 0.0
    %826 = vmatpush1.msra.mxu0 0.0
    %827 = vmatprep.subr.mxu0 0.0
    %828 = vmatpush1.msra.mxu0 0.0
    %829 = vmatprep.subr.mxu0 0.0
    %830 = vmatpush1.msra.mxu0 0.0
    %831 = vmatprep.subr.mxu0 0.0
    %832 = vmatpush1.msra.mxu0 0.0
    %833 = vmatprep.subr.mxu0 0.0
    %834 = vmatpush1.msra.mxu0 0.0
    %835 = vmatprep.subr.mxu0 0.0
    %836 = vmatpush1.msra.mxu0 0.0
    %837 = vmatprep.subr.mxu0 0.0
    %838 = vmatpush1.msra.mxu0 0.0
    %839 = vmatprep.subr.mxu0 0.0
    %840 = vmatpush1.msra.mxu0 0.0
    %841 = vmatprep.subr.mxu0 0.0
    %842 = vmatpush1.msra.mxu0 0.0
    %843 = vmatprep.subr.mxu0 0.0
    %844 = vmatpush1.msra.mxu0 0.0
    %845 = vmatprep.subr.mxu0 0.0
    %846 = vmatpush1.msra.mxu0 0.0
    %847 = vmatprep.subr.mxu0 0.0
    %848 = vmatpush1.msra.mxu0 0.0
    %849 = vmatprep.subr.mxu0 0.0
    %850 = vmatpush1.msra.mxu0 0.0
    %851 = vmatprep.subr.mxu0 0.0
    %852 = vmatpush1.msra.mxu0 0.0
    %853 = vmatprep.subr.mxu0 0.0
    %854 = vmatpush1.msra.mxu0 0.0
    %855 = vmatprep.subr.mxu0 0.0
    %856 = vmatpush1.msra.mxu0 0.0
    %857 = vmatprep.subr.mxu0 0.0
    %858 = vmatpush1.msra.mxu0 0.0
    %859 = vmatprep.subr.mxu0 0.0
    %860 = vmatpush1.msra.mxu0 0.0
    %861 = vmatprep.subr.mxu0 0.0
    %862 = vmatpush1.msra.mxu0 0.0
    %863 = vmatprep.subr.mxu0 0.0
    %864 = vmatpush1.msra.mxu0 0.0
    %865 = vmatprep.subr.mxu0 0.0
    %866 = vmatpush1.msra.mxu0 0.0
    %867 = vmatprep.subr.mxu0 0.0
    %868 = vmatpush1.msra.mxu0 0.0
    %869 = vmatprep.subr.mxu0 0.0
    %870 = vmatpush1.msra.mxu0 0.0
    %871 = vmatprep.mubr.f32.mxu0 0.0
    %872 = vmatmul.mubr.f32.gmra.mrb[0].mxu0 %v802
    %v873 = vpop.f32.mrb[0].mxu0
    %v874 = vadd.f32 %v799, %v873
    %v875 = vpop.f32.mrb[0].mxu0
    %876 = vmatprep.mubr.f32.mxu0 0.0
    %877 = vmatmul.mubr.f32.gmra.mrb[0].mxu0 %v805
    %v878 = vpop.f32.mrb[0].mxu0
    %v879 = vadd.f32 %v799, %v878
    %v880 = vpop.f32.mrb[0].mxu0
    %881 = vdwg.mxu0
    %v882 = vadd.f32 %v707, %v874
    %v883 = vadd.f32 %v708, %v879
    %v884 = vsel %vm97, %v882, 0.0
    %885 = vadd.xlane.f32.xlu0 %v884
    %v886 = vpop.xlane.xlu0 %885
    %v887 = vsel %vm97, %v883, 0.0
    %888 = vadd.xlane.f32.xlu0 %v887
    %v889 = vpop.xlane.xlu0 %888
    %v890 = vmul.f32 %v886, 0.03125
    %v891 = vmul.f32 %v889, 0.03125
    %v892 = vmul.f32 %v882, %v882
    %v893 = vmul.f32 %v883, %v883
    %v894 = vsel %vm97, %v892, 0.0
    %895 = vadd.xlane.f32.xlu0 %v894
    %v896 = vpop.xlane.xlu0 %895
    %v897 = vsel %vm97, %v893, 0.0
    %898 = vadd.xlane.f32.xlu0 %v897
    %v899 = vpop.xlane.xlu0 %898
    %v900 = vmul.f32 %v896, 0.03125
    %v901 = vmul.f32 %v899, 0.03125
    %v902 = vmul.f32 %v890, %v890
    %v903 = vmul.f32 %v891, %v891
    %v904 = vsub.f32 %v900, %v902
    %v905 = vsub.f32 %v901, %v903
    %v906 = vsub.f32 %v882, %v890
    %v907 = vsub.f32 %v883, %v891
    %v908 = vadd.f32 %v904, 1e-05
    %v909 = vadd.f32 %v905, 1e-05
    %v910 = vrsqrt.pop %v908
    %v911 = vrsqrt.pop %v909
    %v912 = vmul.f32 %v906, %v910
    %v913 = vmul.f32 %v907, %v911
    %v914 = vlaneseq
    %v915 = vshrl.u32 %v914, 7
    %v916 = vsub.s32 6, %v915
    %v917 = vrot.slane %v92, %v916
    %v918 = vmul.f32 %v912, %v917
    %v919 = vmul.f32 %v913, %v917
    %v920 = vlaneseq
    %v921 = vshrl.u32 %v920, 7
    %v922 = vsub.s32 7, %v921
    %v923 = vrot.slane %v92, %v922
    %v924 = vadd.f32 %v918, %v923
    %v925 = vadd.f32 %v919, %v923
    %926 = vst.msk [vmem:[#allocation8] sm:$0xff] %vm97, %v924
    %927 = vst.msk [vmem:[#allocation8 + $0x8] sm:$0xff] %vm97, %v925
    // Predicated region
    $region26: #{tpu_custom_call.1} parent=1 // pred_check
      _
    $region27: #{tpu_custom_call.1} parent=1 // pred_check_branch
      %929 = sbr.rel (0) target = $region29
    $region28: #{tpu_custom_call.1} parent=1 // pred_region
      %s931 = ssub.s32 256, 256
      %932 = vsyncadd [#allocation4], %s931
      %s933 = sshll.u32 [#allocation8], 4
      %s934 = int_to_ptr.vmem [resolvable:$true] %s933
      %939 = dma.vmem_to_hbm [thread:$0]  %s934, 256, %s3, [#allocation4], 128, 128, 8
    $region29: #{tpu_custom_call.1} parent=1 // pred_fallthru
      _
    // Predicated region
    $region30: #{tpu_custom_call.1} parent=1 // pred_check
      _
    $region31: #{tpu_custom_call.1} parent=1 // pred_check_branch
      %941 = sbr.rel (0) target = $region33
    $region32: #{tpu_custom_call.1} parent=1 // pred_region
      %942 = dma.done [#allocation4], 256
    $region33: #{tpu_custom_call.1} parent=1 // pred_fallthru
      _
    %943 = vsyncpa [#allocation3], 1
    %944 = vsyncpa [#allocation6], 1
    %945 = vsyncpa [#allocation4], 1

</llo_original>
